<compile_context>
chip_gen: v6e
topology: v6e:2x2x1
jax: 0.10.0
libtpu: 0.0.40
codegen_flags: <defaults>
</compile_context>

<pallas_src>
import jax
import jax.numpy as jnp
from jax import lax
from jax.experimental import pallas as pl
from jax.experimental.pallas import tpu as pltpu


def _make_scale_mul_kernel(rows: int, group: int, hw: int):
    """Kernel computing o[r, c*hw + j] = x[r, c*hw + j] * s[r, c].

    x_ref: (rows, group*hw), s_ref: (rows, group), o_ref: (rows, group*hw).
    `group` is a power of two (guaranteed by the wrapper).
    """
    width = group * hw

    def kernel(x_ref, s_ref, o_ref):
        # ---- 0/1 selector, stacked 3x along K:  rhs[k, l] = (l // hw == k % group)
        # Built with iota + compares (no integer division); exactly representable
        # in bf16.  `group` is a power of two so `% group` is a bitwise AND.
        c_idx = lax.broadcasted_iota(jnp.int32, (3 * group, width), 0) & (group - 1)
        l_idx = lax.broadcasted_iota(jnp.int32, (3 * group, width), 1)
        lower = c_idx * hw
        rhs = jnp.where((l_idx >= lower) & (l_idx < lower + hw), 1.0, 0.0)
        rhs = rhs.astype(jnp.bfloat16)                      # (3*group, width)

        # ---- Exact 3-way bf16 split of the f32 scale:  s == hi + mid + lo.
        s = s_ref[...].astype(jnp.float32)                  # (rows, group)
        s_hi = s.astype(jnp.bfloat16)
        r1 = s - s_hi.astype(jnp.float32)
        s_mid = r1.astype(jnp.bfloat16)
        s_lo = (r1 - s_mid.astype(jnp.float32)).astype(jnp.bfloat16)
        lhs = jnp.concatenate([s_hi, s_mid, s_lo], axis=1)  # (rows, 3*group) bf16

        # ---- Expand the scale along the packed row:  s_exp[r, l] == s[r, l // hw]
        # exactly (each output element is one bf16 piece * 1.0 plus exact zeros;
        # the f32 accumulation of the disjoint-mantissa pieces is exact).
        s_exp = jnp.dot(lhs, rhs, preferred_element_type=jnp.float32)

        # ---- Lane-dense elementwise multiply (VPU), explicit output cast.
        o_ref[...] = (x_ref[...].astype(jnp.float32) * s_exp).astype(o_ref.dtype)

    return kernel


def _pick_group(num_rows_total: int, hw: int) -> int:
    """Largest power-of-two channel group so each packed row is a few vregs wide."""
    g = 1
    while (num_rows_total % (2 * g) == 0) and ((2 * g) * hw <= 1024):
        g *= 2
    return g


@jax.jit
def channel_scale_mul(x_nchw: jax.Array, scale_nc11: jax.Array) -> jax.Array:
    """Computes x_nchw * scale_nc11 (broadcast over H, W) via a Pallas kernel."""
    N, C, H, W = x_nchw.shape
    assert scale_nc11.shape == (N, C, 1, 1)

    HW = H * W
    R = N * C                       # one scale per (n, c) pair
    G = _pick_group(R, HW)          # channels packed per row (power of two)
    assert (G & (G - 1)) == 0 and R % G == 0
    rows = R // G
    width = G * HW

    # Free views of the contiguous NCHW / NC11 buffers — no HBM transposes.
    x2d = x_nchw.reshape(rows, width)       # e.g. (144, 784)
    s2d = scale_nc11.reshape(rows, G)       # e.g. (144, 16)

    flops = R * HW
    bytes_accessed = 2 * R * HW * x_nchw.dtype.itemsize + R * scale_nc11.dtype.itemsize

    out2d = pl.pallas_call(
        _make_scale_mul_kernel(rows, G, HW),
        out_shape=jax.ShapeDtypeStruct((rows, width), x_nchw.dtype),
        # Single resident block: whole problem (<~1 MB) fits VMEM on
        # v5e/v6e/v7x; extra grid steps only add ~0.35 us each here.
        grid=(1,),
        in_specs=[
            pl.BlockSpec((rows, width), lambda i: (0, 0)),
            pl.BlockSpec((rows, G), lambda i: (0, 0)),
        ],
        out_specs=pl.BlockSpec((rows, width), lambda i: (0, 0)),
        compiler_params=pltpu.CompilerParams(
            dimension_semantics=("arbitrary",),
        ),
        cost_estimate=pl.CostEstimate(
            flops=flops,
            transcendentals=0,
            bytes_accessed=bytes_accessed,
        ),
    )(x2d, s2d)

    # (rows, width) -> NCHW (free view).
    return out2d.reshape(N, C, H, W)


if __name__ == "__main__":
    key = jax.random.PRNGKey(0)
    k1, k2 = jax.random.split(key)

    # Shapes implied by the reference module's forward pass.
    x625 = jax.random.normal(k1, (1, 2304, 7, 7), dtype=jnp.float32)
    x630 = jax.random.normal(k2, (1, 2304, 1, 1), dtype=jnp.float32)

    out = channel_scale_mul(x625, x630)
    jax.block_until_ready(out)

    # Correctness check against plain-JAX broadcasting semantics (exact multiply).
    ref = x625 * x630
    assert out.shape == ref.shape == (1, 2304, 7, 7)
    assert out.dtype == ref.dtype
    assert jnp.allclose(out, ref, atol=1e-6, rtol=1e-6)

    print("KERNEL_OK")
</pallas_src>

<mosaic_0001>
module attributes {stable_mosaic.version = 11 : i64} {
  func.func @kernel(%arg0: i32, %arg1: memref<144x784xf32, #tpu.memory_space<vmem>>, %arg2: memref<144x16xf32, #tpu.memory_space<vmem>>, %arg3: memref<144x784xf32, #tpu.memory_space<vmem>>) attributes {dimension_semantics = [#tpu.dimension_semantics<arbitrary>], iteration_bounds = array<i64: 1>, scalar_prefetch = 0 : i64, scratch_operands = 0 : i64, tpu.core_type = #tpu.core_type<tc>, window_params = [{pipeline_mode = #tpu.pipeline_mode<synchronous>, transform_indices = @transform_0, window_bounds = array<i64: 144, 784>}, {pipeline_mode = #tpu.pipeline_mode<synchronous>, transform_indices = @transform_1, window_bounds = array<i64: 144, 16>}, {pipeline_mode = #tpu.pipeline_mode<synchronous>, transform_indices = @transform_2, window_bounds = array<i64: 144, 784>}]} {
    %0 = tpu.iota {dimensions = array<i32: 0>} : vector<48x784xi32>
    %c15_i32 = arith.constant 15 : i32
    %1 = vector.broadcast %c15_i32 : i32 to vector<48x784xi32>
    %2 = arith.andi %0, %1 : vector<48x784xi32>
    %3 = tpu.iota {dimensions = array<i32: 1>} : vector<48x784xi32>
    %c49_i32 = arith.constant 49 : i32
    %4 = vector.broadcast %c49_i32 : i32 to vector<48x784xi32>
    %5 = arith.muli %2, %4 : vector<48x784xi32>
    %6 = arith.cmpi sge, %3, %5 : vector<48x784xi32>
    %c49_i32_0 = arith.constant 49 : i32
    %7 = vector.broadcast %c49_i32_0 : i32 to vector<48x784xi32>
    %8 = arith.addi %5, %7 : vector<48x784xi32>
    %9 = arith.cmpi slt, %3, %8 : vector<48x784xi32>
    %10 = arith.andi %6, %9 : vector<48x784xi1>
    %cst = arith.constant 1.000000e+00 : f32
    %cst_1 = arith.constant 0.000000e+00 : f32
    %11 = vector.broadcast %cst : f32 to vector<48x784xf32>
    %12 = vector.broadcast %cst_1 : f32 to vector<48x784xf32>
    %13 = arith.select %10, %11, %12 : vector<48x784xi1>, vector<48x784xf32>
    %14 = arith.truncf %13 : vector<48x784xf32> to vector<48x784xbf16>
    %c0 = arith.constant 0 : index
    %c0_2 = arith.constant 0 : index
    %15 = vector.load %arg2[%c0, %c0_2] : memref<144x16xf32, #tpu.memory_space<vmem>>, vector<144x16xf32>
    %16 = arith.truncf %15 : vector<144x16xf32> to vector<144x16xbf16>
    %17 = arith.extf %16 : vector<144x16xbf16> to vector<144x16xf32>
    %18 = arith.subf %15, %17 : vector<144x16xf32>
    %19 = arith.truncf %18 : vector<144x16xf32> to vector<144x16xbf16>
    %20 = arith.extf %19 : vector<144x16xbf16> to vector<144x16xf32>
    %21 = arith.subf %18, %20 : vector<144x16xf32>
    %22 = arith.truncf %21 : vector<144x16xf32> to vector<144x16xbf16>
    %23 = tpu.concatenate %16, %19, %22 in 1 : vector<144x16xbf16>, vector<144x16xbf16>, vector<144x16xbf16> -> vector<144x48xbf16>
    %cst_3 = arith.constant dense<0.000000e+00> : vector<144x784xf32>
    %24 = tpu.matmul %23, %14, %cst_3 {dimension_numbers = #tpu.dot_dimension_numbers<[1], [0], [0], [1], [0, 0, 1, 1], [], []>} : vector<144x48xbf16>, vector<48x784xbf16>, vector<144x784xf32> -> vector<144x784xf32>
    %c0_4 = arith.constant 0 : index
    %c0_5 = arith.constant 0 : index
    %25 = vector.load %arg1[%c0_4, %c0_5] : memref<144x784xf32, #tpu.memory_space<vmem>>, vector<144x784xf32>
    %26 = arith.mulf %25, %24 : vector<144x784xf32>
    %c0_6 = arith.constant 0 : index
    %c0_7 = arith.constant 0 : index
    %27 = vector.load %arg3[%c0_6, %c0_7] : memref<144x784xf32, #tpu.memory_space<vmem>>, vector<144x784xf32>
    tpu.vector_store %arg3[%c0_6, %c0_7], %26 {strides = array<i32>} : memref<144x784xf32, #tpu.memory_space<vmem>>, vector<144x784xf32>,
    return
  }
  func.func @transform_0(%arg0: i32) -> (i32, i32) {
    %c0_i32 = arith.constant 0 : i32
    %c0_i32_0 = arith.constant 0 : i32
    %c0_i32_1 = arith.constant 0 : i32
    return %c0_i32, %c0_i32_0 : i32, i32
  }
  func.func @transform_1(%arg0: i32) -> (i32, i32) {
    %c0_i32 = arith.constant 0 : i32
    %c0_i32_0 = arith.constant 0 : i32
    %c0_i32_1 = arith.constant 0 : i32
    return %c0_i32, %c0_i32_0 : i32, i32
  }
  func.func @transform_2(%arg0: i32) -> (i32, i32) {
    %c0_i32 = arith.constant 0 : i32
    %c0_i32_0 = arith.constant 0 : i32
    %c0_i32_1 = arith.constant 0 : i32
    return %c0_i32, %c0_i32_0 : i32, i32
  }
}

</mosaic_0001>

<llo_original>
// kernel: channel_scale_mul.1
$region0: #{channel_scale_mul.1}
  #allocation0 [shape = 'u32[]', space=smem, size = 0x4, offset = 0x4, fixed_abs, tag = 'smem constant byte address 0x4 - core index']
  #allocation1 [shape = 'u32[144,128]{1,0:T(1,128)}', space=vmem, size = 0x12000, scoped, tag = 'internal scratch']
  %s0 = inlined_call_operand.vmem [shape: f32[144,784], index: 0, kind: input, shape index: {}]
  %s1 = inlined_call_operand.vmem [shape: f32[144,16], index: 1, kind: input, shape index: {}]
  %s2 = inlined_call_operand.vmem [shape: f32[144,784], index: 2, kind: output, shape index: {}]
  %s3 = sld [smem:[#allocation0]]
  $region18: #{channel_scale_mul.1} parent=0
    _
  %s5 = ssub.s32 1, %s3
  %s6 = scalar_select 0, %s5, %s3
  // Predicated region
  $region2: #{channel_scale_mul.1} parent=0 // pred_check
    _
  $region3: #{channel_scale_mul.1} parent=0 // pred_check_branch
    %8 = sbr.rel (0) target = $region5
  $region4: #{channel_scale_mul.1} parent=0 // pred_region
    _
  $region5: #{channel_scale_mul.1} parent=0 // pred_fallthru
    _
  // Predicated region
  $region6: #{channel_scale_mul.1} parent=0 // pred_check
    _
  $region7: #{channel_scale_mul.1} parent=0 // pred_check_branch
    %10 = sbr.rel (0) target = $region9
  $region8: #{channel_scale_mul.1} parent=0 // pred_region
    _
  $region9: #{channel_scale_mul.1} parent=0 // pred_fallthru
    _
  %v12 = vlaneseq
  %v13 = vshrl.u32 %v12, 7
  %v14 = vadd.s32 %v13, 8
  %v15 = vadd.s32 %v13, 16
  %v16 = vadd.s32 %v13, 24
  %v17 = vadd.s32 %v13, 32
  %v18 = vadd.s32 %v13, 40
  %v19 = vand.u32 %v13, 15
  %v20 = vand.u32 %v14, 15
  %v21 = vand.u32 %v15, 15
  %v22 = vand.u32 %v16, 15
  %v23 = vand.u32 %v17, 15
  %v24 = vand.u32 %v18, 15
  %v25 = vlaneseq
  %v26 = vand.u32 %v25, 127
  %v27 = vadd.s32 %v26, 128
  %v28 = vadd.s32 %v26, 256
  %v29 = vadd.s32 %v26, 384
  %v30 = vadd.s32 %v26, 512
  %v31 = vadd.s32 %v26, 640
  %v32 = vadd.s32 %v26, 768
  %v33 = vmul.u32 %v19, 49
  %v34 = vmul.u32 %v20, 49
  %v35 = vmul.u32 %v21, 49
  %v36 = vmul.u32 %v22, 49
  %v37 = vmul.u32 %v23, 49
  %v38 = vmul.u32 %v24, 49
  %vm39 = vcmp.ge.s32.totalorder %v26, %v33
  %vm40 = vcmp.ge.s32.totalorder %v27, %v33
  %vm41 = vcmp.ge.s32.totalorder %v28, %v33
  %vm42 = vcmp.ge.s32.totalorder %v29, %v33
  %vm43 = vcmp.ge.s32.totalorder %v30, %v33
  %vm44 = vcmp.ge.s32.totalorder %v31, %v33
  %vm45 = vcmp.ge.s32.totalorder %v32, %v33
  %vm46 = vcmp.ge.s32.totalorder %v26, %v34
  %vm47 = vcmp.ge.s32.totalorder %v27, %v34
  %vm48 = vcmp.ge.s32.totalorder %v28, %v34
  %vm49 = vcmp.ge.s32.totalorder %v29, %v34
  %vm50 = vcmp.ge.s32.totalorder %v30, %v34
  %vm51 = vcmp.ge.s32.totalorder %v31, %v34
  %vm52 = vcmp.ge.s32.totalorder %v32, %v34
  %vm53 = vcmp.ge.s32.totalorder %v26, %v35
  %vm54 = vcmp.ge.s32.totalorder %v27, %v35
  %vm55 = vcmp.ge.s32.totalorder %v28, %v35
  %vm56 = vcmp.ge.s32.totalorder %v29, %v35
  %vm57 = vcmp.ge.s32.totalorder %v30, %v35
  %vm58 = vcmp.ge.s32.totalorder %v31, %v35
  %vm59 = vcmp.ge.s32.totalorder %v32, %v35
  %vm60 = vcmp.ge.s32.totalorder %v26, %v36
  %vm61 = vcmp.ge.s32.totalorder %v27, %v36
  %vm62 = vcmp.ge.s32.totalorder %v28, %v36
  %vm63 = vcmp.ge.s32.totalorder %v29, %v36
  %vm64 = vcmp.ge.s32.totalorder %v30, %v36
  %vm65 = vcmp.ge.s32.totalorder %v31, %v36
  %vm66 = vcmp.ge.s32.totalorder %v32, %v36
  %vm67 = vcmp.ge.s32.totalorder %v26, %v37
  %vm68 = vcmp.ge.s32.totalorder %v27, %v37
  %vm69 = vcmp.ge.s32.totalorder %v28, %v37
  %vm70 = vcmp.ge.s32.totalorder %v29, %v37
  %vm71 = vcmp.ge.s32.totalorder %v30, %v37
  %vm72 = vcmp.ge.s32.totalorder %v31, %v37
  %vm73 = vcmp.ge.s32.totalorder %v32, %v37
  %vm74 = vcmp.ge.s32.totalorder %v26, %v38
  %vm75 = vcmp.ge.s32.totalorder %v27, %v38
  %vm76 = vcmp.ge.s32.totalorder %v28, %v38
  %vm77 = vcmp.ge.s32.totalorder %v29, %v38
  %vm78 = vcmp.ge.s32.totalorder %v30, %v38
  %vm79 = vcmp.ge.s32.totalorder %v31, %v38
  %vm80 = vcmp.ge.s32.totalorder %v32, %v38
  %v81 = vadd.s32 %v33, 49
  %v82 = vadd.s32 %v34, 49
  %v83 = vadd.s32 %v35, 49
  %v84 = vadd.s32 %v36, 49
  %v85 = vadd.s32 %v37, 49
  %v86 = vadd.s32 %v38, 49
  %vm87 = vcmp.lt.s32.totalorder %v26, %v81
  %vm88 = vcmp.lt.s32.totalorder %v27, %v81
  %vm89 = vcmp.lt.s32.totalorder %v28, %v81
  %vm90 = vcmp.lt.s32.totalorder %v29, %v81
  %vm91 = vcmp.lt.s32.totalorder %v30, %v81
  %vm92 = vcmp.lt.s32.totalorder %v31, %v81
  %vm93 = vcmp.lt.s32.totalorder %v32, %v81
  %vm94 = vcmp.lt.s32.totalorder %v26, %v82
  %vm95 = vcmp.lt.s32.totalorder %v27, %v82
  %vm96 = vcmp.lt.s32.totalorder %v28, %v82
  %vm97 = vcmp.lt.s32.totalorder %v29, %v82
  %vm98 = vcmp.lt.s32.totalorder %v30, %v82
  %vm99 = vcmp.lt.s32.totalorder %v31, %v82
  %vm100 = vcmp.lt.s32.totalorder %v32, %v82
  %vm101 = vcmp.lt.s32.totalorder %v26, %v83
  %vm102 = vcmp.lt.s32.totalorder %v27, %v83
  %vm103 = vcmp.lt.s32.totalorder %v28, %v83
  %vm104 = vcmp.lt.s32.totalorder %v29, %v83
  %vm105 = vcmp.lt.s32.totalorder %v30, %v83
  %vm106 = vcmp.lt.s32.totalorder %v31, %v83
  %vm107 = vcmp.lt.s32.totalorder %v32, %v83
  %vm108 = vcmp.lt.s32.totalorder %v26, %v84
  %vm109 = vcmp.lt.s32.totalorder %v27, %v84
  %vm110 = vcmp.lt.s32.totalorder %v28, %v84
  %vm111 = vcmp.lt.s32.totalorder %v29, %v84
  %vm112 = vcmp.lt.s32.totalorder %v30, %v84
  %vm113 = vcmp.lt.s32.totalorder %v31, %v84
  %vm114 = vcmp.lt.s32.totalorder %v32, %v84
  %vm115 = vcmp.lt.s32.totalorder %v26, %v85
  %vm116 = vcmp.lt.s32.totalorder %v27, %v85
  %vm117 = vcmp.lt.s32.totalorder %v28, %v85
  %vm118 = vcmp.lt.s32.totalorder %v29, %v85
  %vm119 = vcmp.lt.s32.totalorder %v30, %v85
  %vm120 = vcmp.lt.s32.totalorder %v31, %v85
  %vm121 = vcmp.lt.s32.totalorder %v32, %v85
  %vm122 = vcmp.lt.s32.totalorder %v26, %v86
  %vm123 = vcmp.lt.s32.totalorder %v27, %v86
  %vm124 = vcmp.lt.s32.totalorder %v28, %v86
  %vm125 = vcmp.lt.s32.totalorder %v29, %v86
  %vm126 = vcmp.lt.s32.totalorder %v30, %v86
  %vm127 = vcmp.lt.s32.totalorder %v31, %v86
  %vm128 = vcmp.lt.s32.totalorder %v32, %v86
  %vm129 = vmand %vm39, %vm87
  %vm130 = vmand %vm40, %vm88
  %vm131 = vmand %vm41, %vm89
  %vm132 = vmand %vm42, %vm90
  %vm133 = vmand %vm43, %vm91
  %vm134 = vmand %vm44, %vm92
  %vm135 = vmand %vm45, %vm93
  %vm136 = vmand %vm46, %vm94
  %vm137 = vmand %vm47, %vm95
  %vm138 = vmand %vm48, %vm96
  %vm139 = vmand %vm49, %vm97
  %vm140 = vmand %vm50, %vm98
  %vm141 = vmand %vm51, %vm99
  %vm142 = vmand %vm52, %vm100
  %vm143 = vmand %vm53, %vm101
  %vm144 = vmand %vm54, %vm102
  %vm145 = vmand %vm55, %vm103
  %vm146 = vmand %vm56, %vm104
  %vm147 = vmand %vm57, %vm105
  %vm148 = vmand %vm58, %vm106
  %vm149 = vmand %vm59, %vm107
  %vm150 = vmand %vm60, %vm108
  %vm151 = vmand %vm61, %vm109
  %vm152 = vmand %vm62, %vm110
  %vm153 = vmand %vm63, %vm111
  %vm154 = vmand %vm64, %vm112
  %vm155 = vmand %vm65, %vm113
  %vm156 = vmand %vm66, %vm114
  %vm157 = vmand %vm67, %vm115
  %vm158 = vmand %vm68, %vm116
  %vm159 = vmand %vm69, %vm117
  %vm160 = vmand %vm70, %vm118
  %vm161 = vmand %vm71, %vm119
  %vm162 = vmand %vm72, %vm120
  %vm163 = vmand %vm73, %vm121
  %vm164 = vmand %vm74, %vm122
  %vm165 = vmand %vm75, %vm123
  %vm166 = vmand %vm76, %vm124
  %vm167 = vmand %vm77, %vm125
  %vm168 = vmand %vm78, %vm126
  %vm169 = vmand %vm79, %vm127
  %vm170 = vmand %vm80, %vm128
  %v171 = vsel %vm129, 1.0, 0.0
  %v172 = vsel %vm130, 1.0, 0.0
  %v173 = vsel %vm131, 1.0, 0.0
  %v174 = vsel %vm132, 1.0, 0.0
  %v175 = vsel %vm133, 1.0, 0.0
  %v176 = vsel %vm134, 1.0, 0.0
  %v177 = vsel %vm135, 1.0, 0.0
  %v178 = vsel %vm136, 1.0, 0.0
  %v179 = vsel %vm137, 1.0, 0.0
  %v180 = vsel %vm138, 1.0, 0.0
  %v181 = vsel %vm139, 1.0, 0.0
  %v182 = vsel %vm140, 1.0, 0.0
  %v183 = vsel %vm141, 1.0, 0.0
  %v184 = vsel %vm142, 1.0, 0.0
  %v185 = vsel %vm143, 1.0, 0.0
  %v186 = vsel %vm144, 1.0, 0.0
  %v187 = vsel %vm145, 1.0, 0.0
  %v188 = vsel %vm146, 1.0, 0.0
  %v189 = vsel %vm147, 1.0, 0.0
  %v190 = vsel %vm148, 1.0, 0.0
  %v191 = vsel %vm149, 1.0, 0.0
  %v192 = vsel %vm150, 1.0, 0.0
  %v193 = vsel %vm151, 1.0, 0.0
  %v194 = vsel %vm152, 1.0, 0.0
  %v195 = vsel %vm153, 1.0, 0.0
  %v196 = vsel %vm154, 1.0, 0.0
  %v197 = vsel %vm155, 1.0, 0.0
  %v198 = vsel %vm156, 1.0, 0.0
  %v199 = vsel %vm157, 1.0, 0.0
  %v200 = vsel %vm158, 1.0, 0.0
  %v201 = vsel %vm159, 1.0, 0.0
  %v202 = vsel %vm160, 1.0, 0.0
  %v203 = vsel %vm161, 1.0, 0.0
  %v204 = vsel %vm162, 1.0, 0.0
  %v205 = vsel %vm163, 1.0, 0.0
  %v206 = vsel %vm164, 1.0, 0.0
  %v207 = vsel %vm165, 1.0, 0.0
  %v208 = vsel %vm166, 1.0, 0.0
  %v209 = vsel %vm167, 1.0, 0.0
  %v210 = vsel %vm168, 1.0, 0.0
  %v211 = vsel %vm169, 1.0, 0.0
  %v212 = vsel %vm170, 1.0, 0.0
  %v213 = vpack.c.bf16 %v178, %v171
  %v214 = vpack.c.bf16 %v179, %v172
  %v215 = vpack.c.bf16 %v180, %v173
  %v216 = vpack.c.bf16 %v181, %v174
  %v217 = vpack.c.bf16 %v182, %v175
  %v218 = vpack.c.bf16 %v183, %v176
  %v219 = vpack.c.bf16 %v184, %v177
  %v220 = vpack.c.bf16 %v192, %v185
  %v221 = vpack.c.bf16 %v193, %v186
  %v222 = vpack.c.bf16 %v194, %v187
  %v223 = vpack.c.bf16 %v195, %v188
  %v224 = vpack.c.bf16 %v196, %v189
  %v225 = vpack.c.bf16 %v197, %v190
  %v226 = vpack.c.bf16 %v198, %v191
  %v227 = vpack.c.bf16 %v206, %v199
  %v228 = vpack.c.bf16 %v207, %v200
  %v229 = vpack.c.bf16 %v208, %v201
  %v230 = vpack.c.bf16 %v209, %v202
  %v231 = vpack.c.bf16 %v210, %v203
  %v232 = vpack.c.bf16 %v211, %v204
  %v233 = vpack.c.bf16 %v212, %v205
  %v234 = vld [vmem:[%s1] sm:$0xff]
  %v235 = vld [vmem:[%s1 + $0x8] sm:$0xff]
  %v236 = vld [vmem:[%s1 + $0x10] sm:$0xff]
  %v237 = vld [vmem:[%s1 + $0x18] sm:$0xff]
  %v238 = vld [vmem:[%s1 + $0x20] sm:$0xff]
  %v239 = vld [vmem:[%s1 + $0x28] sm:$0xff]
  %v240 = vld [vmem:[%s1 + $0x30] sm:$0xff]
  %v241 = vld [vmem:[%s1 + $0x38] sm:$0xff]
  %v242 = vld [vmem:[%s1 + $0x40] sm:$0xff]
  %v243 = vld [vmem:[%s1 + $0x48] sm:$0xff]
  %v244 = vld [vmem:[%s1 + $0x50] sm:$0xff]
  %v245 = vld [vmem:[%s1 + $0x58] sm:$0xff]
  %v246 = vld [vmem:[%s1 + $0x60] sm:$0xff]
  %v247 = vld [vmem:[%s1 + $0x68] sm:$0xff]
  %v248 = vld [vmem:[%s1 + $0x70] sm:$0xff]
  %v249 = vld [vmem:[%s1 + $0x78] sm:$0xff]
  %v250 = vld [vmem:[%s1 + $0x80] sm:$0xff]
  %v251 = vld [vmem:[%s1 + $0x88] sm:$0xff]
  %v252 = vpack.c.bf16 %v235, %v234
  %v253 = vpack.c.bf16 %v237, %v236
  %v254 = vpack.c.bf16 %v239, %v238
  %v255 = vpack.c.bf16 %v241, %v240
  %v256 = vpack.c.bf16 %v243, %v242
  %v257 = vpack.c.bf16 %v245, %v244
  %v258 = vpack.c.bf16 %v247, %v246
  %v259 = vpack.c.bf16 %v249, %v248
  %v260 = vpack.c.bf16 %v251, %v250
  %v261 = vunpack.c.l.bf16 %v252
  %v262 = vunpack.c.h.bf16 %v252
  %v263 = vunpack.c.l.bf16 %v253
  %v264 = vunpack.c.h.bf16 %v253
  %v265 = vunpack.c.l.bf16 %v254
  %v266 = vunpack.c.h.bf16 %v254
  %v267 = vunpack.c.l.bf16 %v255
  %v268 = vunpack.c.h.bf16 %v255
  %v269 = vunpack.c.l.bf16 %v256
  %v270 = vunpack.c.h.bf16 %v256
  %v271 = vunpack.c.l.bf16 %v257
  %v272 = vunpack.c.h.bf16 %v257
  %v273 = vunpack.c.l.bf16 %v258
  %v274 = vunpack.c.h.bf16 %v258
  %v275 = vunpack.c.l.bf16 %v259
  %v276 = vunpack.c.h.bf16 %v259
  %v277 = vunpack.c.l.bf16 %v260
  %v278 = vunpack.c.h.bf16 %v260
  %v279 = vsub.f32 %v234, %v261
  %v280 = vsub.f32 %v235, %v262
  %v281 = vsub.f32 %v236, %v263
  %v282 = vsub.f32 %v237, %v264
  %v283 = vsub.f32 %v238, %v265
  %v284 = vsub.f32 %v239, %v266
  %v285 = vsub.f32 %v240, %v267
  %v286 = vsub.f32 %v241, %v268
  %v287 = vsub.f32 %v242, %v269
  %v288 = vsub.f32 %v243, %v270
  %v289 = vsub.f32 %v244, %v271
  %v290 = vsub.f32 %v245, %v272
  %v291 = vsub.f32 %v246, %v273
  %v292 = vsub.f32 %v247, %v274
  %v293 = vsub.f32 %v248, %v275
  %v294 = vsub.f32 %v249, %v276
  %v295 = vsub.f32 %v250, %v277
  %v296 = vsub.f32 %v251, %v278
  %v297 = vpack.c.bf16 %v280, %v279
  %v298 = vpack.c.bf16 %v282, %v281
  %v299 = vpack.c.bf16 %v284, %v283
  %v300 = vpack.c.bf16 %v286, %v285
  %v301 = vpack.c.bf16 %v288, %v287
  %v302 = vpack.c.bf16 %v290, %v289
  %v303 = vpack.c.bf16 %v292, %v291
  %v304 = vpack.c.bf16 %v294, %v293
  %v305 = vpack.c.bf16 %v296, %v295
  %v306 = vunpack.c.l.bf16 %v297
  %v307 = vunpack.c.h.bf16 %v297
  %v308 = vunpack.c.l.bf16 %v298
  %v309 = vunpack.c.h.bf16 %v298
  %v310 = vunpack.c.l.bf16 %v299
  %v311 = vunpack.c.h.bf16 %v299
  %v312 = vunpack.c.l.bf16 %v300
  %v313 = vunpack.c.h.bf16 %v300
  %v314 = vunpack.c.l.bf16 %v301
  %v315 = vunpack.c.h.bf16 %v301
  %v316 = vunpack.c.l.bf16 %v302
  %v317 = vunpack.c.h.bf16 %v302
  %v318 = vunpack.c.l.bf16 %v303
  %v319 = vunpack.c.h.bf16 %v303
  %v320 = vunpack.c.l.bf16 %v304
  %v321 = vunpack.c.h.bf16 %v304
  %v322 = vunpack.c.l.bf16 %v305
  %v323 = vunpack.c.h.bf16 %v305
  %v324 = vsub.f32 %v279, %v306
  %v325 = vsub.f32 %v280, %v307
  %v326 = vsub.f32 %v281, %v308
  %v327 = vsub.f32 %v282, %v309
  %v328 = vsub.f32 %v283, %v310
  %v329 = vsub.f32 %v284, %v311
  %v330 = vsub.f32 %v285, %v312
  %v331 = vsub.f32 %v286, %v313
  %v332 = vsub.f32 %v287, %v314
  %v333 = vsub.f32 %v288, %v315
  %v334 = vsub.f32 %v289, %v316
  %v335 = vsub.f32 %v290, %v317
  %v336 = vsub.f32 %v291, %v318
  %v337 = vsub.f32 %v292, %v319
  %v338 = vsub.f32 %v293, %v320
  %v339 = vsub.f32 %v294, %v321
  %v340 = vsub.f32 %v295, %v322
  %v341 = vsub.f32 %v296, %v323
  %v342 = vpack.c.bf16 %v325, %v324
  %v343 = vpack.c.bf16 %v327, %v326
  %v344 = vpack.c.bf16 %v329, %v328
  %v345 = vpack.c.bf16 %v331, %v330
  %v346 = vpack.c.bf16 %v333, %v332
  %v347 = vpack.c.bf16 %v335, %v334
  %v348 = vpack.c.bf16 %v337, %v336
  %v349 = vpack.c.bf16 %v339, %v338
  %v350 = vpack.c.bf16 %v341, %v340
  %360 = vrot.lane.b32.xlu0 %v297, 16
  %v361 = vpop.permute.xlu0 %360
  %362 = vrot.lane.b32.xlu0 %v298, 16
  %v363 = vpop.permute.xlu0 %362
  %364 = vrot.lane.b32.xlu0 %v299, 16
  %v365 = vpop.permute.xlu0 %364
  %366 = vrot.lane.b32.xlu0 %v300, 16
  %v367 = vpop.permute.xlu0 %366
  %368 = vrot.lane.b32.xlu0 %v301, 16
  %v369 = vpop.permute.xlu0 %368
  %370 = vrot.lane.b32.xlu0 %v302, 16
  %v371 = vpop.permute.xlu0 %370
  %372 = vrot.lane.b32.xlu0 %v303, 16
  %v373 = vpop.permute.xlu0 %372
  %374 = vrot.lane.b32.xlu0 %v304, 16
  %v375 = vpop.permute.xlu0 %374
  %376 = vrot.lane.b32.xlu0 %v305, 16
  %v377 = vpop.permute.xlu0 %376
  %387 = vrot.lane.b32.xlu0 %v342, 32
  %v388 = vpop.permute.xlu0 %387
  %389 = vrot.lane.b32.xlu0 %v343, 32
  %v390 = vpop.permute.xlu0 %389
  %391 = vrot.lane.b32.xlu0 %v344, 32
  %v392 = vpop.permute.xlu0 %391
  %393 = vrot.lane.b32.xlu0 %v345, 32
  %v394 = vpop.permute.xlu0 %393
  %395 = vrot.lane.b32.xlu0 %v346, 32
  %v396 = vpop.permute.xlu0 %395
  %397 = vrot.lane.b32.xlu0 %v347, 32
  %v398 = vpop.permute.xlu0 %397
  %399 = vrot.lane.b32.xlu0 %v348, 32
  %v400 = vpop.permute.xlu0 %399
  %401 = vrot.lane.b32.xlu0 %v349, 32
  %v402 = vpop.permute.xlu0 %401
  %403 = vrot.lane.b32.xlu0 %v350, 32
  %v404 = vpop.permute.xlu0 %403
  %vm405 = vcmask 130048
  %v408 = vsel %vm405, %v252, %v361
  %v411 = vsel %vm405, %v253, %v363
  %v414 = vsel %vm405, %v254, %v365
  %v417 = vsel %vm405, %v255, %v367
  %v420 = vsel %vm405, %v256, %v369
  %v423 = vsel %vm405, %v257, %v371
  %v426 = vsel %vm405, %v258, %v373
  %v429 = vsel %vm405, %v259, %v375
  %v432 = vsel %vm405, %v260, %v377
  %vm433 = vcmask 261120
  %v435 = vsel %vm433, %v408, %v388
  %v437 = vsel %vm433, %v411, %v390
  %v439 = vsel %vm433, %v414, %v392
  %v441 = vsel %vm433, %v417, %v394
  %v443 = vsel %vm433, %v420, %v396
  %v445 = vsel %vm433, %v423, %v398
  %v447 = vsel %vm433, %v426, %v400
  %v449 = vsel %vm433, %v429, %v402
  %v451 = vsel %vm433, %v432, %v404
  %vm452 = vcmask 392192
  %v453 = vsel %vm452, %v435, 0
  %v455 = vsel %vm452, %v437, 0
  %v457 = vsel %vm452, %v439, 0
  %v459 = vsel %vm452, %v441, 0
  %v461 = vsel %vm452, %v443, 0
  %v463 = vsel %vm452, %v445, 0
  %v465 = vsel %vm452, %v447, 0
  %v467 = vsel %vm452, %v449, 0
  %v469 = vsel %vm452, %v451, 0
  %471 = vmatprep.subr.bf16.mxu0 0
  %472 = vmatpush1.bf16.msra.mxu0 0
  %473 = vmatprep.subr.bf16.mxu0 0
  %474 = vmatpush1.bf16.msra.mxu0 0
  %475 = vmatprep.subr.bf16.mxu0 0
  %476 = vmatpush1.bf16.msra.mxu0 0
  %477 = vmatprep.subr.bf16.mxu0 0
  %478 = vmatpush1.bf16.msra.mxu0 0
  %479 = vmatprep.subr.bf16.mxu0 0
  %480 = vmatpush1.bf16.msra.mxu0 0
  %481 = vmatprep.subr.bf16.mxu0 %v228
  %482 = vmatpush1.bf16.msra.mxu0 %v227
  %483 = vmatprep.subr.bf16.mxu0 %v221
  %484 = vmatpush1.bf16.msra.mxu0 %v220
  %485 = vmatprep.subr.bf16.mxu0 %v214
  %486 = vmatpush1.bf16.msra.mxu0 %v213
  %487 = vmatprep.subr.bf16.mxu0 0
  %488 = vmatpush2.bf16.msra.mxu0 0
  %489 = vmatprep.subr.bf16.mxu0 0
  %490 = vmatpush2.bf16.msra.mxu0 0
  %491 = vmatprep.subr.bf16.mxu0 0
  %492 = vmatpush2.bf16.msra.mxu0 0
  %493 = vmatprep.subr.bf16.mxu0 0
  %494 = vmatpush2.bf16.msra.mxu0 0
  %495 = vmatprep.subr.bf16.mxu0 0
  %496 = vmatpush2.bf16.msra.mxu0 0
  %497 = vmatprep.subr.bf16.mxu0 0
  %498 = vmatpush2.bf16.msra.mxu0 0
  %499 = vmatprep.subr.bf16.mxu0 0
  %500 = vmatpush2.bf16.msra.mxu0 0
  %501 = vmatprep.subr.bf16.mxu0 0
  %502 = vmatpush2.bf16.msra.mxu0 0
  %503 = vmatprep.mubr.bf16.mxu0 0
  %504 = vmatmul.mubr.bf16.gmra.mxu0 %v453
  %v505 = vpop.f32.mrf.mxu0
  %v506 = vadd.f32 0.0, %v505
  %v507 = vpop.f32.mrf.mxu0
  %v508 = vadd.f32 0.0, %v507
  %v509 = vpop.f32.mrf.mxu0
  %v510 = vadd.f32 0.0, %v509
  %v511 = vpop.f32.mrf.mxu0
  %v512 = vadd.f32 0.0, %v511
  %513 = vmatprep.mubr.bf16.mxu0 0
  %514 = vmatmul.mubr.bf16.gmra.mxu0 %v455
  %v515 = vpop.f32.mrf.mxu0
  %v516 = vadd.f32 0.0, %v515
  %v517 = vpop.f32.mrf.mxu0
  %v518 = vadd.f32 0.0, %v517
  %v519 = vpop.f32.mrf.mxu0
  %v520 = vadd.f32 0.0, %v519
  %v521 = vpop.f32.mrf.mxu0
  %v522 = vadd.f32 0.0, %v521
  %523 = vmatprep.mubr.bf16.mxu0 0
  %524 = vmatmul.mubr.bf16.gmra.mxu0 %v457
  %v525 = vpop.f32.mrf.mxu0
  %v526 = vadd.f32 0.0, %v525
  %v527 = vpop.f32.mrf.mxu0
  %v528 = vadd.f32 0.0, %v527
  %v529 = vpop.f32.mrf.mxu0
  %v530 = vadd.f32 0.0, %v529
  %v531 = vpop.f32.mrf.mxu0
  %v532 = vadd.f32 0.0, %v531
  %533 = vmatprep.mubr.bf16.mxu0 0
  %534 = vmatmul.mubr.bf16.gmra.mxu0 %v459
  %v535 = vpop.f32.mrf.mxu0
  %v536 = vadd.f32 0.0, %v535
  %v537 = vpop.f32.mrf.mxu0
  %v538 = vadd.f32 0.0, %v537
  %v539 = vpop.f32.mrf.mxu0
  %v540 = vadd.f32 0.0, %v539
  %v541 = vpop.f32.mrf.mxu0
  %v542 = vadd.f32 0.0, %v541
  %543 = vmatprep.mubr.bf16.mxu0 0
  %544 = vmatmul.mubr.bf16.gmra.mxu0 %v461
  %v545 = vpop.f32.mrf.mxu0
  %v546 = vadd.f32 0.0, %v545
  %v547 = vpop.f32.mrf.mxu0
  %v548 = vadd.f32 0.0, %v547
  %v549 = vpop.f32.mrf.mxu0
  %v550 = vadd.f32 0.0, %v549
  %v551 = vpop.f32.mrf.mxu0
  %v552 = vadd.f32 0.0, %v551
  %553 = vmatprep.mubr.bf16.mxu0 0
  %554 = vmatmul.mubr.bf16.gmra.mxu0 %v463
  %v555 = vpop.f32.mrf.mxu0
  %v556 = vadd.f32 0.0, %v555
  %v557 = vpop.f32.mrf.mxu0
  %v558 = vadd.f32 0.0, %v557
  %v559 = vpop.f32.mrf.mxu0
  %v560 = vadd.f32 0.0, %v559
  %v561 = vpop.f32.mrf.mxu0
  %v562 = vadd.f32 0.0, %v561
  %563 = vmatprep.mubr.bf16.mxu0 0
  %564 = vmatmul.mubr.bf16.gmra.mxu0 %v465
  %v565 = vpop.f32.mrf.mxu0
  %v566 = vadd.f32 0.0, %v565
  %v567 = vpop.f32.mrf.mxu0
  %v568 = vadd.f32 0.0, %v567
  %v569 = vpop.f32.mrf.mxu0
  %v570 = vadd.f32 0.0, %v569
  %v571 = vpop.f32.mrf.mxu0
  %v572 = vadd.f32 0.0, %v571
  %573 = vmatprep.mubr.bf16.mxu0 0
  %574 = vmatmul.mubr.bf16.gmra.mxu0 %v467
  %v575 = vpop.f32.mrf.mxu0
  %v576 = vadd.f32 0.0, %v575
  %v577 = vpop.f32.mrf.mxu0
  %v578 = vadd.f32 0.0, %v577
  %v579 = vpop.f32.mrf.mxu0
  %v580 = vadd.f32 0.0, %v579
  %v581 = vpop.f32.mrf.mxu0
  %v582 = vadd.f32 0.0, %v581
  %583 = vmatprep.mubr.bf16.mxu0 0
  %584 = vmatmul.mubr.bf16.gmra.mxu0 %v469
  %v585 = vpop.f32.mrf.mxu0
  %v586 = vadd.f32 0.0, %v585
  %v587 = vpop.f32.mrf.mxu0
  %v588 = vadd.f32 0.0, %v587
  %v589 = vpop.f32.mrf.mxu0
  %v590 = vadd.f32 0.0, %v589
  %v591 = vpop.f32.mrf.mxu0
  %v592 = vadd.f32 0.0, %v591
  %593 = vdwg.mxu0
  %594 = vmatprep.subr.bf16.mxu0 0
  %595 = vmatpush1.bf16.msra.mxu0 0
  %596 = vmatprep.subr.bf16.mxu0 0
  %597 = vmatpush1.bf16.msra.mxu0 0
  %598 = vmatprep.subr.bf16.mxu0 0
  %599 = vmatpush1.bf16.msra.mxu0 0
  %600 = vmatprep.subr.bf16.mxu0 0
  %601 = vmatpush1.bf16.msra.mxu0 0
  %602 = vmatprep.subr.bf16.mxu0 0
  %603 = vmatpush1.bf16.msra.mxu0 0
  %604 = vmatprep.subr.bf16.mxu0 %v230
  %605 = vmatpush1.bf16.msra.mxu0 %v229
  %606 = vmatprep.subr.bf16.mxu0 %v223
  %607 = vmatpush1.bf16.msra.mxu0 %v222
  %608 = vmatprep.subr.bf16.mxu0 %v216
  %609 = vmatpush1.bf16.msra.mxu0 %v215
  %610 = vmatprep.subr.bf16.mxu0 0
  %611 = vmatpush2.bf16.msra.mxu0 0
  %612 = vmatprep.subr.bf16.mxu0 0
  %613 = vmatpush2.bf16.msra.mxu0 0
  %614 = vmatprep.subr.bf16.mxu0 0
  %615 = vmatpush2.bf16.msra.mxu0 0
  %616 = vmatprep.subr.bf16.mxu0 0
  %617 = vmatpush2.bf16.msra.mxu0 0
  %618 = vmatprep.subr.bf16.mxu0 0
  %619 = vmatpush2.bf16.msra.mxu0 0
  %620 = vmatprep.subr.bf16.mxu0 0
  %621 = vmatpush2.bf16.msra.mxu0 0
  %622 = vmatprep.subr.bf16.mxu0 0
  %623 = vmatpush2.bf16.msra.mxu0 0
  %624 = vmatprep.subr.bf16.mxu0 0
  %625 = vmatpush2.bf16.msra.mxu0 0
  %626 = vmatprep.mubr.bf16.mxu0 0
  %627 = vmatmul.mubr.bf16.gmra.mxu0 %v453
  %v628 = vpop.f32.mrf.mxu0
  %v629 = vadd.f32 0.0, %v628
  %v630 = vpop.f32.mrf.mxu0
  %v631 = vadd.f32 0.0, %v630
  %v632 = vpop.f32.mrf.mxu0
  %v633 = vadd.f32 0.0, %v632
  %v634 = vpop.f32.mrf.mxu0
  %v635 = vadd.f32 0.0, %v634
  %636 = vmatprep.mubr.bf16.mxu0 0
  %637 = vmatmul.mubr.bf16.gmra.mxu0 %v455
  %v638 = vpop.f32.mrf.mxu0
  %v639 = vadd.f32 0.0, %v638
  %v640 = vpop.f32.mrf.mxu0
  %v641 = vadd.f32 0.0, %v640
  %v642 = vpop.f32.mrf.mxu0
  %v643 = vadd.f32 0.0, %v642
  %v644 = vpop.f32.mrf.mxu0
  %v645 = vadd.f32 0.0, %v644
  %646 = vmatprep.mubr.bf16.mxu0 0
  %647 = vmatmul.mubr.bf16.gmra.mxu0 %v457
  %v648 = vpop.f32.mrf.mxu0
  %v649 = vadd.f32 0.0, %v648
  %v650 = vpop.f32.mrf.mxu0
  %v651 = vadd.f32 0.0, %v650
  %v652 = vpop.f32.mrf.mxu0
  %v653 = vadd.f32 0.0, %v652
  %v654 = vpop.f32.mrf.mxu0
  %v655 = vadd.f32 0.0, %v654
  %656 = vmatprep.mubr.bf16.mxu0 0
  %657 = vmatmul.mubr.bf16.gmra.mxu0 %v459
  %v658 = vpop.f32.mrf.mxu0
  %v659 = vadd.f32 0.0, %v658
  %v660 = vpop.f32.mrf.mxu0
  %v661 = vadd.f32 0.0, %v660
  %v662 = vpop.f32.mrf.mxu0
  %v663 = vadd.f32 0.0, %v662
  %v664 = vpop.f32.mrf.mxu0
  %v665 = vadd.f32 0.0, %v664
  %666 = vmatprep.mubr.bf16.mxu0 0
  %667 = vmatmul.mubr.bf16.gmra.mxu0 %v461
  %v668 = vpop.f32.mrf.mxu0
  %v669 = vadd.f32 0.0, %v668
  %v670 = vpop.f32.mrf.mxu0
  %v671 = vadd.f32 0.0, %v670
  %v672 = vpop.f32.mrf.mxu0
  %v673 = vadd.f32 0.0, %v672
  %v674 = vpop.f32.mrf.mxu0
  %v675 = vadd.f32 0.0, %v674
  %676 = vmatprep.mubr.bf16.mxu0 0
  %677 = vmatmul.mubr.bf16.gmra.mxu0 %v463
  %v678 = vpop.f32.mrf.mxu0
  %v679 = vadd.f32 0.0, %v678
  %v680 = vpop.f32.mrf.mxu0
  %v681 = vadd.f32 0.0, %v680
  %v682 = vpop.f32.mrf.mxu0
  %v683 = vadd.f32 0.0, %v682
  %v684 = vpop.f32.mrf.mxu0
  %v685 = vadd.f32 0.0, %v684
  %686 = vmatprep.mubr.bf16.mxu0 0
  %687 = vmatmul.mubr.bf16.gmra.mxu0 %v465
  %v688 = vpop.f32.mrf.mxu0
  %v689 = vadd.f32 0.0, %v688
  %v690 = vpop.f32.mrf.mxu0
  %v691 = vadd.f32 0.0, %v690
  %v692 = vpop.f32.mrf.mxu0
  %v693 = vadd.f32 0.0, %v692
  %v694 = vpop.f32.mrf.mxu0
  %v695 = vadd.f32 0.0, %v694
  %696 = vmatprep.mubr.bf16.mxu0 0
  %697 = vmatmul.mubr.bf16.gmra.mxu0 %v467
  %v698 = vpop.f32.mrf.mxu0
  %v699 = vadd.f32 0.0, %v698
  %v700 = vpop.f32.mrf.mxu0
  %v701 = vadd.f32 0.0, %v700
  %v702 = vpop.f32.mrf.mxu0
  %v703 = vadd.f32 0.0, %v702
  %v704 = vpop.f32.mrf.mxu0
  %v705 = vadd.f32 0.0, %v704
  %706 = vmatprep.mubr.bf16.mxu0 0
  %707 = vmatmul.mubr.bf16.gmra.mxu0 %v469
  %v708 = vpop.f32.mrf.mxu0
  %v709 = vadd.f32 0.0, %v708
  %v710 = vpop.f32.mrf.mxu0
  %v711 = vadd.f32 0.0, %v710
  %v712 = vpop.f32.mrf.mxu0
  %v713 = vadd.f32 0.0, %v712
  %v714 = vpop.f32.mrf.mxu0
  %v715 = vadd.f32 0.0, %v714
  %716 = vdwg.mxu0
  %717 = vmatprep.subr.bf16.mxu0 0
  %718 = vmatpush1.bf16.msra.mxu0 0
  %719 = vmatprep.subr.bf16.mxu0 0
  %720 = vmatpush1.bf16.msra.mxu0 0
  %721 = vmatprep.subr.bf16.mxu0 0
  %722 = vmatpush1.bf16.msra.mxu0 0
  %723 = vmatprep.subr.bf16.mxu0 0
  %724 = vmatpush1.bf16.msra.mxu0 0
  %725 = vmatprep.subr.bf16.mxu0 0
  %726 = vmatpush1.bf16.msra.mxu0 0
  %727 = vmatprep.subr.bf16.mxu0 %v232
  %728 = vmatpush1.bf16.msra.mxu0 %v231
  %729 = vmatprep.subr.bf16.mxu0 %v225
  %730 = vmatpush1.bf16.msra.mxu0 %v224
  %731 = vmatprep.subr.bf16.mxu0 %v218
  %732 = vmatpush1.bf16.msra.mxu0 %v217
  %733 = vmatprep.subr.bf16.mxu0 0
  %734 = vmatpush2.bf16.msra.mxu0 0
  %735 = vmatprep.subr.bf16.mxu0 0
  %736 = vmatpush2.bf16.msra.mxu0 0
  %737 = vmatprep.subr.bf16.mxu0 0
  %738 = vmatpush2.bf16.msra.mxu0 0
  %739 = vmatprep.subr.bf16.mxu0 0
  %740 = vmatpush2.bf16.msra.mxu0 0
  %741 = vmatprep.subr.bf16.mxu0 0
  %742 = vmatpush2.bf16.msra.mxu0 0
  %743 = vmatprep.subr.bf16.mxu0 0
  %744 = vmatpush2.bf16.msra.mxu0 0
  %745 = vmatprep.subr.bf16.mxu0 0
  %746 = vmatpush2.bf16.msra.mxu0 0
  %747 = vmatprep.subr.bf16.mxu0 0
  %748 = vmatpush2.bf16.msra.mxu0 0
  %749 = vmatprep.mubr.bf16.mxu0 0
  %750 = vmatmul.mubr.bf16.gmra.mxu0 %v453
  %v751 = vpop.f32.mrf.mxu0
  %v752 = vadd.f32 0.0, %v751
  %v753 = vpop.f32.mrf.mxu0
  %v754 = vadd.f32 0.0, %v753
  %v755 = vpop.f32.mrf.mxu0
  %v756 = vadd.f32 0.0, %v755
  %v757 = vpop.f32.mrf.mxu0
  %v758 = vadd.f32 0.0, %v757
  %759 = vmatprep.mubr.bf16.mxu0 0
  %760 = vmatmul.mubr.bf16.gmra.mxu0 %v455
  %v761 = vpop.f32.mrf.mxu0
  %v762 = vadd.f32 0.0, %v761
  %v763 = vpop.f32.mrf.mxu0
  %v764 = vadd.f32 0.0, %v763
  %v765 = vpop.f32.mrf.mxu0
  %v766 = vadd.f32 0.0, %v765
  %v767 = vpop.f32.mrf.mxu0
  %v768 = vadd.f32 0.0, %v767
  %769 = vmatprep.mubr.bf16.mxu0 0
  %770 = vmatmul.mubr.bf16.gmra.mxu0 %v457
  %v771 = vpop.f32.mrf.mxu0
  %v772 = vadd.f32 0.0, %v771
  %v773 = vpop.f32.mrf.mxu0
  %v774 = vadd.f32 0.0, %v773
  %v775 = vpop.f32.mrf.mxu0
  %v776 = vadd.f32 0.0, %v775
  %v777 = vpop.f32.mrf.mxu0
  %v778 = vadd.f32 0.0, %v777
  %779 = vmatprep.mubr.bf16.mxu0 0
  %780 = vmatmul.mubr.bf16.gmra.mxu0 %v459
  %v781 = vpop.f32.mrf.mxu0
  %v782 = vadd.f32 0.0, %v781
  %v783 = vpop.f32.mrf.mxu0
  %v784 = vadd.f32 0.0, %v783
  %v785 = vpop.f32.mrf.mxu0
  %v786 = vadd.f32 0.0, %v785
  %v787 = vpop.f32.mrf.mxu0
  %v788 = vadd.f32 0.0, %v787
  %789 = vmatprep.mubr.bf16.mxu0 0
  %790 = vmatmul.mubr.bf16.gmra.mxu0 %v461
  %v791 = vpop.f32.mrf.mxu0
  %v792 = vadd.f32 0.0, %v791
  %v793 = vpop.f32.mrf.mxu0
  %v794 = vadd.f32 0.0, %v793
  %v795 = vpop.f32.mrf.mxu0
  %v796 = vadd.f32 0.0, %v795
  %v797 = vpop.f32.mrf.mxu0
  %v798 = vadd.f32 0.0, %v797
  %799 = vmatprep.mubr.bf16.mxu0 0
  %800 = vmatmul.mubr.bf16.gmra.mxu0 %v463
  %v801 = vpop.f32.mrf.mxu0
  %v802 = vadd.f32 0.0, %v801
  %v803 = vpop.f32.mrf.mxu0
  %v804 = vadd.f32 0.0, %v803
  %v805 = vpop.f32.mrf.mxu0
  %v806 = vadd.f32 0.0, %v805
  %v807 = vpop.f32.mrf.mxu0
  %v808 = vadd.f32 0.0, %v807
  %809 = vmatprep.mubr.bf16.mxu0 0
  %810 = vmatmul.mubr.bf16.gmra.mxu0 %v465
  %v811 = vpop.f32.mrf.mxu0
  %v812 = vadd.f32 0.0, %v811
  %v813 = vpop.f32.mrf.mxu0
  %v814 = vadd.f32 0.0, %v813
  %v815 = vpop.f32.mrf.mxu0
  %v816 = vadd.f32 0.0, %v815
  %v817 = vpop.f32.mrf.mxu0
  %v818 = vadd.f32 0.0, %v817
  %819 = vmatprep.mubr.bf16.mxu0 0
  %820 = vmatmul.mubr.bf16.gmra.mxu0 %v467
  %v821 = vpop.f32.mrf.mxu0
  %v822 = vadd.f32 0.0, %v821
  %v823 = vpop.f32.mrf.mxu0
  %v824 = vadd.f32 0.0, %v823
  %v825 = vpop.f32.mrf.mxu0
  %v826 = vadd.f32 0.0, %v825
  %v827 = vpop.f32.mrf.mxu0
  %v828 = vadd.f32 0.0, %v827
  %829 = vmatprep.mubr.bf16.mxu0 0
  %830 = vmatmul.mubr.bf16.gmra.mxu0 %v469
  %v831 = vpop.f32.mrf.mxu0
  %v832 = vadd.f32 0.0, %v831
  %v833 = vpop.f32.mrf.mxu0
  %v834 = vadd.f32 0.0, %v833
  %v835 = vpop.f32.mrf.mxu0
  %v836 = vadd.f32 0.0, %v835
  %v837 = vpop.f32.mrf.mxu0
  %v838 = vadd.f32 0.0, %v837
  %839 = vdwg.mxu0
  %840 = vmatprep.subr.bf16.mxu0 0
  %841 = vmatpush1.bf16.msra.mxu0 0
  %842 = vmatprep.subr.bf16.mxu0 0
  %843 = vmatpush1.bf16.msra.mxu0 0
  %844 = vmatprep.subr.bf16.mxu0 0
  %845 = vmatpush1.bf16.msra.mxu0 0
  %846 = vmatprep.subr.bf16.mxu0 0
  %847 = vmatpush1.bf16.msra.mxu0 0
  %848 = vmatprep.subr.bf16.mxu0 0
  %849 = vmatpush1.bf16.msra.mxu0 0
  %850 = vmatprep.subr.bf16.mxu0 0
  %851 = vmatpush1.bf16.msra.mxu0 %v233
  %852 = vmatprep.subr.bf16.mxu0 0
  %853 = vmatpush1.bf16.msra.mxu0 %v226
  %854 = vmatprep.subr.bf16.mxu0 0
  %855 = vmatpush1.bf16.msra.mxu0 %v219
  %856 = vmatprep.subr.bf16.mxu0 0
  %857 = vmatpush2.bf16.msra.mxu0 0
  %858 = vmatprep.subr.bf16.mxu0 0
  %859 = vmatpush2.bf16.msra.mxu0 0
  %860 = vmatprep.subr.bf16.mxu0 0
  %861 = vmatpush2.bf16.msra.mxu0 0
  %862 = vmatprep.subr.bf16.mxu0 0
  %863 = vmatpush2.bf16.msra.mxu0 0
  %864 = vmatprep.subr.bf16.mxu0 0
  %865 = vmatpush2.bf16.msra.mxu0 0
  %866 = vmatprep.subr.bf16.mxu0 0
  %867 = vmatpush2.bf16.msra.mxu0 0
  %868 = vmatprep.subr.bf16.mxu0 0
  %869 = vmatpush2.bf16.msra.mxu0 0
  %870 = vmatprep.subr.bf16.mxu0 0
  %871 = vmatpush2.bf16.msra.mxu0 0
  %872 = vmatprep.mubr.bf16.mxu0 0
  %873 = vmatmul.mubr.bf16.gmra.mxu0 %v453
  %v874 = vpop.f32.mrf.mxu0
  %v875 = vadd.f32 0.0, %v874
  %v876 = vpop.f32.mrf.mxu0
  %v877 = vpop.f32.mrf.mxu0
  %v878 = vadd.f32 0.0, %v877
  %v879 = vpop.f32.mrf.mxu0
  %880 = vmatprep.mubr.bf16.mxu0 0
  %881 = vmatmul.mubr.bf16.gmra.mxu0 %v455
  %v882 = vpop.f32.mrf.mxu0
  %v883 = vadd.f32 0.0, %v882
  %v884 = vpop.f32.mrf.mxu0
  %v885 = vpop.f32.mrf.mxu0
  %v886 = vadd.f32 0.0, %v885
  %v887 = vpop.f32.mrf.mxu0
  %888 = vmatprep.mubr.bf16.mxu0 0
  %889 = vmatmul.mubr.bf16.gmra.mxu0 %v457
  %v890 = vpop.f32.mrf.mxu0
  %v891 = vadd.f32 0.0, %v890
  %v892 = vpop.f32.mrf.mxu0
  %v893 = vpop.f32.mrf.mxu0
  %v894 = vadd.f32 0.0, %v893
  %v895 = vpop.f32.mrf.mxu0
  %896 = vmatprep.mubr.bf16.mxu0 0
  %897 = vmatmul.mubr.bf16.gmra.mxu0 %v459
  %v898 = vpop.f32.mrf.mxu0
  %v899 = vadd.f32 0.0, %v898
  %v900 = vpop.f32.mrf.mxu0
  %v901 = vpop.f32.mrf.mxu0
  %v902 = vadd.f32 0.0, %v901
  %v903 = vpop.f32.mrf.mxu0
  %904 = vmatprep.mubr.bf16.mxu0 0
  %905 = vmatmul.mubr.bf16.gmra.mxu0 %v461
  %v906 = vpop.f32.mrf.mxu0
  %v907 = vadd.f32 0.0, %v906
  %v908 = vpop.f32.mrf.mxu0
  %v909 = vpop.f32.mrf.mxu0
  %v910 = vadd.f32 0.0, %v909
  %v911 = vpop.f32.mrf.mxu0
  %912 = vmatprep.mubr.bf16.mxu0 0
  %913 = vmatmul.mubr.bf16.gmra.mxu0 %v463
  %v914 = vpop.f32.mrf.mxu0
  %v915 = vadd.f32 0.0, %v914
  %v916 = vpop.f32.mrf.mxu0
  %v917 = vpop.f32.mrf.mxu0
  %v918 = vadd.f32 0.0, %v917
  %v919 = vpop.f32.mrf.mxu0
  %920 = vmatprep.mubr.bf16.mxu0 0
  %921 = vmatmul.mubr.bf16.gmra.mxu0 %v465
  %v922 = vpop.f32.mrf.mxu0
  %v923 = vadd.f32 0.0, %v922
  %v924 = vpop.f32.mrf.mxu0
  %v925 = vpop.f32.mrf.mxu0
  %v926 = vadd.f32 0.0, %v925
  %v927 = vpop.f32.mrf.mxu0
  %928 = vmatprep.mubr.bf16.mxu0 0
  %929 = vmatmul.mubr.bf16.gmra.mxu0 %v467
  %v930 = vpop.f32.mrf.mxu0
  %v931 = vadd.f32 0.0, %v930
  %v932 = vpop.f32.mrf.mxu0
  %v933 = vpop.f32.mrf.mxu0
  %v934 = vadd.f32 0.0, %v933
  %v935 = vpop.f32.mrf.mxu0
  %936 = vmatprep.mubr.bf16.mxu0 0
  %937 = vmatmul.mubr.bf16.gmra.mxu0 %v469
  %v938 = vpop.f32.mrf.mxu0
  %v939 = vadd.f32 0.0, %v938
  %v940 = vpop.f32.mrf.mxu0
  %v941 = vpop.f32.mrf.mxu0
  %v942 = vadd.f32 0.0, %v941
  %v943 = vpop.f32.mrf.mxu0
  %944 = vdwg.mxu0
  %v945 = vld [vmem:[%s0] sm:$0xff]
  %v946 = vld [vmem:[%s0 + $0x8] sm:$0xff]
  %v947 = vld [vmem:[%s0 + $0x10] sm:$0xff]
  %v948 = vld [vmem:[%s0 + $0x18] sm:$0xff]
  %v949 = vld [vmem:[%s0 + $0x20] sm:$0xff]
  %v950 = vld [vmem:[%s0 + $0x28] sm:$0xff]
  %v951 = vld [vmem:[%s0 + $0x30] sm:$0xff]
  %v952 = vld [vmem:[%s0 + $0x38] sm:$0xff]
  %v953 = vld [vmem:[%s0 + $0x40] sm:$0xff]
  %v954 = vld [vmem:[%s0 + $0x48] sm:$0xff]
  %v955 = vld [vmem:[%s0 + $0x50] sm:$0xff]
  %v956 = vld [vmem:[%s0 + $0x58] sm:$0xff]
  %v957 = vld [vmem:[%s0 + $0x60] sm:$0xff]
  %v958 = vld [vmem:[%s0 + $0x68] sm:$0xff]
  %v959 = vld [vmem:[%s0 + $0x70] sm:$0xff]
  %v960 = vld [vmem:[%s0 + $0x78] sm:$0xff]
  %v961 = vld [vmem:[%s0 + $0x80] sm:$0xff]
  %v962 = vld [vmem:[%s0 + $0x88] sm:$0xff]
  %v963 = vld [vmem:[%s0 + $0x90] sm:$0xff]
  %v964 = vld [vmem:[%s0 + $0x98] sm:$0xff]
  %v965 = vld [vmem:[%s0 + $0xa0] sm:$0xff]
  %v966 = vld [vmem:[%s0 + $0xa8] sm:$0xff]
  %v967 = vld [vmem:[%s0 + $0xb0] sm:$0xff]
  %v968 = vld [vmem:[%s0 + $0xb8] sm:$0xff]
  %v969 = vld [vmem:[%s0 + $0xc0] sm:$0xff]
  %v970 = vld [vmem:[%s0 + $0xc8] sm:$0xff]
  %v971 = vld [vmem:[%s0 + $0xd0] sm:$0xff]
  %v972 = vld [vmem:[%s0 + $0xd8] sm:$0xff]
  %v973 = vld [vmem:[%s0 + $0xe0] sm:$0xff]
  %v974 = vld [vmem:[%s0 + $0xe8] sm:$0xff]
  %v975 = vld [vmem:[%s0 + $0xf0] sm:$0xff]
  %v976 = vld [vmem:[%s0 + $0xf8] sm:$0xff]
  %v977 = vld [vmem:[%s0 + $0x100] sm:$0xff]
  %v978 = vld [vmem:[%s0 + $0x108] sm:$0xff]
  %v979 = vld [vmem:[%s0 + $0x110] sm:$0xff]
  %v980 = vld [vmem:[%s0 + $0x118] sm:$0xff]
  %v981 = vld [vmem:[%s0 + $0x120] sm:$0xff]
  %v982 = vld [vmem:[%s0 + $0x128] sm:$0xff]
  %v983 = vld [vmem:[%s0 + $0x130] sm:$0xff]
  %v984 = vld [vmem:[%s0 + $0x138] sm:$0xff]
  %v985 = vld [vmem:[%s0 + $0x140] sm:$0xff]
  %v986 = vld [vmem:[%s0 + $0x148] sm:$0xff]
  %v987 = vld [vmem:[%s0 + $0x150] sm:$0xff]
  %v988 = vld [vmem:[%s0 + $0x158] sm:$0xff]
  %v989 = vld [vmem:[%s0 + $0x160] sm:$0xff]
  %v990 = vld [vmem:[%s0 + $0x168] sm:$0xff]
  %v991 = vld [vmem:[%s0 + $0x170] sm:$0xff]
  %v992 = vld [vmem:[%s0 + $0x178] sm:$0xff]
  %v993 = vld [vmem:[%s0 + $0x180] sm:$0xff]
  %v994 = vld [vmem:[%s0 + $0x188] sm:$0xff]
  %v995 = vld [vmem:[%s0 + $0x190] sm:$0xff]
  %v996 = vld [vmem:[%s0 + $0x198] sm:$0xff]
  %v997 = vld [vmem:[%s0 + $0x1a0] sm:$0xff]
  %v998 = vld [vmem:[%s0 + $0x1a8] sm:$0xff]
  %v999 = vld [vmem:[%s0 + $0x1b0] sm:$0xff]
  %v1000 = vld [vmem:[%s0 + $0x1b8] sm:$0xff]
  %v1001 = vld [vmem:[%s0 + $0x1c0] sm:$0xff]
  %v1002 = vld [vmem:[%s0 + $0x1c8] sm:$0xff]
  %v1003 = vld [vmem:[%s0 + $0x1d0] sm:$0xff]
  %v1004 = vld [vmem:[%s0 + $0x1d8] sm:$0xff]
  %v1005 = vld [vmem:[%s0 + $0x1e0] sm:$0xff]
  %v1006 = vld [vmem:[%s0 + $0x1e8] sm:$0xff]
  %v1007 = vld [vmem:[%s0 + $0x1f0] sm:$0xff]
  %v1008 = vld [vmem:[%s0 + $0x1f8] sm:$0xff]
  %v1009 = vld [vmem:[%s0 + $0x200] sm:$0xff]
  %v1010 = vld [vmem:[%s0 + $0x208] sm:$0xff]
  %v1011 = vld [vmem:[%s0 + $0x210] sm:$0xff]
  %v1012 = vld [vmem:[%s0 + $0x218] sm:$0xff]
  %v1013 = vld [vmem:[%s0 + $0x220] sm:$0xff]
  %v1014 = vld [vmem:[%s0 + $0x228] sm:$0xff]
  %v1015 = vld [vmem:[%s0 + $0x230] sm:$0xff]
  %v1016 = vld [vmem:[%s0 + $0x238] sm:$0xff]
  %v1017 = vld [vmem:[%s0 + $0x240] sm:$0xff]
  %v1018 = vld [vmem:[%s0 + $0x248] sm:$0xff]
  %v1019 = vld [vmem:[%s0 + $0x250] sm:$0xff]
  %v1020 = vld [vmem:[%s0 + $0x258] sm:$0xff]
  %v1021 = vld [vmem:[%s0 + $0x260] sm:$0xff]
  %v1022 = vld [vmem:[%s0 + $0x268] sm:$0xff]
  %v1023 = vld [vmem:[%s0 + $0x270] sm:$0xff]
  %v1024 = vld [vmem:[%s0 + $0x278] sm:$0xff]
  %v1025 = vld [vmem:[%s0 + $0x280] sm:$0xff]
  %v1026 = vld [vmem:[%s0 + $0x288] sm:$0xff]
  %v1027 = vld [vmem:[%s0 + $0x290] sm:$0xff]
  %v1028 = vld [vmem:[%s0 + $0x298] sm:$0xff]
  %v1029 = vld [vmem:[%s0 + $0x2a0] sm:$0xff]
  %v1030 = vld [vmem:[%s0 + $0x2a8] sm:$0xff]
  %v1031 = vld [vmem:[%s0 + $0x2b0] sm:$0xff]
  %v1032 = vld [vmem:[%s0 + $0x2b8] sm:$0xff]
  %v1033 = vld [vmem:[%s0 + $0x2c0] sm:$0xff]
  %v1034 = vld [vmem:[%s0 + $0x2c8] sm:$0xff]
  %v1035 = vld [vmem:[%s0 + $0x2d0] sm:$0xff]
  %v1036 = vld [vmem:[%s0 + $0x2d8] sm:$0xff]
  %v1037 = vld [vmem:[%s0 + $0x2e0] sm:$0xff]
  %v1038 = vld [vmem:[%s0 + $0x2e8] sm:$0xff]
  %v1039 = vld [vmem:[%s0 + $0x2f0] sm:$0xff]
  %v1040 = vld [vmem:[%s0 + $0x2f8] sm:$0xff]
  %v1041 = vld [vmem:[%s0 + $0x300] sm:$0xff]
  %v1042 = vld [vmem:[%s0 + $0x308] sm:$0xff]
  %v1043 = vld [vmem:[%s0 + $0x310] sm:$0xff]
  %v1044 = vld [vmem:[%s0 + $0x318] sm:$0xff]
  %v1045 = vld [vmem:[%s0 + $0x320] sm:$0xff]
  %v1046 = vld [vmem:[%s0 + $0x328] sm:$0xff]
  %v1047 = vld [vmem:[%s0 + $0x330] sm:$0xff]
  %v1048 = vld [vmem:[%s0 + $0x338] sm:$0xff]
  %v1049 = vld [vmem:[%s0 + $0x340] sm:$0xff]
  %v1050 = vld [vmem:[%s0 + $0x348] sm:$0xff]
  %v1051 = vld [vmem:[%s0 + $0x350] sm:$0xff]
  %v1052 = vld [vmem:[%s0 + $0x358] sm:$0xff]
  %v1053 = vld [vmem:[%s0 + $0x360] sm:$0xff]
  %v1054 = vld [vmem:[%s0 + $0x368] sm:$0xff]
  %v1055 = vld [vmem:[%s0 + $0x370] sm:$0xff]
  %v1056 = vld [vmem:[%s0 + $0x378] sm:$0xff]
  %v1057 = vld [vmem:[%s0 + $0x380] sm:$0xff]
  %v1058 = vld [vmem:[%s0 + $0x388] sm:$0xff]
  %v1059 = vld [vmem:[%s0 + $0x390] sm:$0xff]
  %v1060 = vld [vmem:[%s0 + $0x398] sm:$0xff]
  %v1061 = vld [vmem:[%s0 + $0x3a0] sm:$0xff]
  %v1062 = vld [vmem:[%s0 + $0x3a8] sm:$0xff]
  %v1063 = vld [vmem:[%s0 + $0x3b0] sm:$0xff]
  %v1064 = vld [vmem:[%s0 + $0x3b8] sm:$0xff]
  %v1065 = vld [vmem:[%s0 + $0x3c0] sm:$0xff]
  %v1066 = vld [vmem:[%s0 + $0x3c8] sm:$0xff]
  %v1067 = vld [vmem:[%s0 + $0x3d0] sm:$0xff]
  %v1068 = vld [vmem:[%s0 + $0x3d8] sm:$0xff]
  %v1069 = vld [vmem:[%s0 + $0x3e0] sm:$0xff]
  %v1070 = vld [vmem:[%s0 + $0x3e8] sm:$0xff]
  %v1071 = vmul.f32 %v945, %v506
  %v1072 = vmul.f32 %v946, %v508
  %v1073 = vmul.f32 %v947, %v629
  %v1074 = vmul.f32 %v948, %v631
  %v1075 = vmul.f32 %v949, %v752
  %v1076 = vmul.f32 %v950, %v754
  %v1077 = vmul.f32 %v951, %v875
  %v1078 = vmul.f32 %v952, %v510
  %v1079 = vmul.f32 %v953, %v512
  %v1080 = vmul.f32 %v954, %v633
  %v1081 = vmul.f32 %v955, %v635
  %v1082 = vmul.f32 %v956, %v756
  %v1083 = vmul.f32 %v957, %v758
  %v1084 = vmul.f32 %v958, %v878
  %v1085 = vmul.f32 %v959, %v516
  %v1086 = vmul.f32 %v960, %v518
  %v1087 = vmul.f32 %v961, %v639
  %v1088 = vmul.f32 %v962, %v641
  %v1089 = vmul.f32 %v963, %v762
  %v1090 = vmul.f32 %v964, %v764
  %v1091 = vmul.f32 %v965, %v883
  %v1092 = vmul.f32 %v966, %v520
  %v1093 = vmul.f32 %v967, %v522
  %v1094 = vmul.f32 %v968, %v643
  %v1095 = vmul.f32 %v969, %v645
  %v1096 = vmul.f32 %v970, %v766
  %v1097 = vmul.f32 %v971, %v768
  %v1098 = vmul.f32 %v972, %v886
  %v1099 = vmul.f32 %v973, %v526
  %v1100 = vmul.f32 %v974, %v528
  %v1101 = vmul.f32 %v975, %v649
  %v1102 = vmul.f32 %v976, %v651
  %v1103 = vmul.f32 %v977, %v772
  %v1104 = vmul.f32 %v978, %v774
  %v1105 = vmul.f32 %v979, %v891
  %v1106 = vmul.f32 %v980, %v530
  %v1107 = vmul.f32 %v981, %v532
  %v1108 = vmul.f32 %v982, %v653
  %v1109 = vmul.f32 %v983, %v655
  %v1110 = vmul.f32 %v984, %v776
  %v1111 = vmul.f32 %v985, %v778
  %v1112 = vmul.f32 %v986, %v894
  %v1113 = vmul.f32 %v987, %v536
  %v1114 = vmul.f32 %v988, %v538
  %v1115 = vmul.f32 %v989, %v659
  %v1116 = vmul.f32 %v990, %v661
  %v1117 = vmul.f32 %v991, %v782
  %v1118 = vmul.f32 %v992, %v784
  %v1119 = vmul.f32 %v993, %v899
  %v1120 = vmul.f32 %v994, %v540
  %v1121 = vmul.f32 %v995, %v542
  %v1122 = vmul.f32 %v996, %v663
  %v1123 = vmul.f32 %v997, %v665
  %v1124 = vmul.f32 %v998, %v786
  %v1125 = vmul.f32 %v999, %v788
  %v1126 = vmul.f32 %v1000, %v902
  %v1127 = vmul.f32 %v1001, %v546
  %v1128 = vmul.f32 %v1002, %v548
  %v1129 = vmul.f32 %v1003, %v669
  %v1130 = vmul.f32 %v1004, %v671
  %v1131 = vmul.f32 %v1005, %v792
  %v1132 = vmul.f32 %v1006, %v794
  %v1133 = vmul.f32 %v1007, %v907
  %v1134 = vmul.f32 %v1008, %v550
  %v1135 = vmul.f32 %v1009, %v552
  %v1136 = vmul.f32 %v1010, %v673
  %v1137 = vmul.f32 %v1011, %v675
  %v1138 = vmul.f32 %v1012, %v796
  %v1139 = vmul.f32 %v1013, %v798
  %v1140 = vmul.f32 %v1014, %v910
  %v1141 = vmul.f32 %v1015, %v556
  %v1142 = vmul.f32 %v1016, %v558
  %v1143 = vmul.f32 %v1017, %v679
  %v1144 = vmul.f32 %v1018, %v681
  %v1145 = vmul.f32 %v1019, %v802
  %v1146 = vmul.f32 %v1020, %v804
  %v1147 = vmul.f32 %v1021, %v915
  %v1148 = vmul.f32 %v1022, %v560
  %v1149 = vmul.f32 %v1023, %v562
  %v1150 = vmul.f32 %v1024, %v683
  %v1151 = vmul.f32 %v1025, %v685
  %v1152 = vmul.f32 %v1026, %v806
  %v1153 = vmul.f32 %v1027, %v808
  %v1154 = vmul.f32 %v1028, %v918
  %v1155 = vmul.f32 %v1029, %v566
  %v1156 = vmul.f32 %v1030, %v568
  %v1157 = vmul.f32 %v1031, %v689
  %v1158 = vmul.f32 %v1032, %v691
  %v1159 = vmul.f32 %v1033, %v812
  %v1160 = vmul.f32 %v1034, %v814
  %v1161 = vmul.f32 %v1035, %v923
  %v1162 = vmul.f32 %v1036, %v570
  %v1163 = vmul.f32 %v1037, %v572
  %v1164 = vmul.f32 %v1038, %v693
  %v1165 = vmul.f32 %v1039, %v695
  %v1166 = vmul.f32 %v1040, %v816
  %v1167 = vmul.f32 %v1041, %v818
  %v1168 = vmul.f32 %v1042, %v926
  %v1169 = vmul.f32 %v1043, %v576
  %v1170 = vmul.f32 %v1044, %v578
  %v1171 = vmul.f32 %v1045, %v699
  %v1172 = vmul.f32 %v1046, %v701
  %v1173 = vmul.f32 %v1047, %v822
  %v1174 = vmul.f32 %v1048, %v824
  %v1175 = vmul.f32 %v1049, %v931
  %v1176 = vmul.f32 %v1050, %v580
  %v1177 = vmul.f32 %v1051, %v582
  %v1178 = vmul.f32 %v1052, %v703
  %v1179 = vmul.f32 %v1053, %v705
  %v1180 = vmul.f32 %v1054, %v826
  %v1181 = vmul.f32 %v1055, %v828
  %v1182 = vmul.f32 %v1056, %v934
  %v1183 = vmul.f32 %v1057, %v586
  %v1184 = vmul.f32 %v1058, %v588
  %v1185 = vmul.f32 %v1059, %v709
  %v1186 = vmul.f32 %v1060, %v711
  %v1187 = vmul.f32 %v1061, %v832
  %v1188 = vmul.f32 %v1062, %v834
  %v1189 = vmul.f32 %v1063, %v939
  %v1190 = vmul.f32 %v1064, %v590
  %v1191 = vmul.f32 %v1065, %v592
  %v1192 = vmul.f32 %v1066, %v713
  %v1193 = vmul.f32 %v1067, %v715
  %v1194 = vmul.f32 %v1068, %v836
  %v1195 = vmul.f32 %v1069, %v838
  %v1196 = vmul.f32 %v1070, %v942
  %1197 = vst [vmem:[%s2] sm:$0xff] %v1071
  %1198 = vst [vmem:[%s2 + $0x8] sm:$0xff] %v1072
  %1199 = vst [vmem:[%s2 + $0x10] sm:$0xff] %v1073
  %1200 = vst [vmem:[%s2 + $0x18] sm:$0xff] %v1074
  %1201 = vst [vmem:[%s2 + $0x20] sm:$0xff] %v1075
  %1202 = vst [vmem:[%s2 + $0x28] sm:$0xff] %v1076
  %1203 = vst.msk [vmem:[%s2 + $0x30] sm:$0xff] %vm405, %v1077
  %1204 = vst [vmem:[%s2 + $0x38] sm:$0xff] %v1078
  %1205 = vst [vmem:[%s2 + $0x40] sm:$0xff] %v1079
  %1206 = vst [vmem:[%s2 + $0x48] sm:$0xff] %v1080
  %1207 = vst [vmem:[%s2 + $0x50] sm:$0xff] %v1081
  %1208 = vst [vmem:[%s2 + $0x58] sm:$0xff] %v1082
  %1209 = vst [vmem:[%s2 + $0x60] sm:$0xff] %v1083
  %1210 = vst.msk [vmem:[%s2 + $0x68] sm:$0xff] %vm405, %v1084
  %1211 = vst [vmem:[%s2 + $0x70] sm:$0xff] %v1085
  %1212 = vst [vmem:[%s2 + $0x78] sm:$0xff] %v1086
  %1213 = vst [vmem:[%s2 + $0x80] sm:$0xff] %v1087
  %1214 = vst [vmem:[%s2 + $0x88] sm:$0xff] %v1088
  %1215 = vst [vmem:[%s2 + $0x90] sm:$0xff] %v1089
  %1216 = vst [vmem:[%s2 + $0x98] sm:$0xff] %v1090
  %1217 = vst.msk [vmem:[%s2 + $0xa0] sm:$0xff] %vm405, %v1091
  %1218 = vst [vmem:[%s2 + $0xa8] sm:$0xff] %v1092
  %1219 = vst [vmem:[%s2 + $0xb0] sm:$0xff] %v1093
  %1220 = vst [vmem:[%s2 + $0xb8] sm:$0xff] %v1094
  %1221 = vst [vmem:[%s2 + $0xc0] sm:$0xff] %v1095
  %1222 = vst [vmem:[%s2 + $0xc8] sm:$0xff] %v1096
  %1223 = vst [vmem:[%s2 + $0xd0] sm:$0xff] %v1097
  %1224 = vst.msk [vmem:[%s2 + $0xd8] sm:$0xff] %vm405, %v1098
  %1225 = vst [vmem:[%s2 + $0xe0] sm:$0xff] %v1099
  %1226 = vst [vmem:[%s2 + $0xe8] sm:$0xff] %v1100
  %1227 = vst [vmem:[%s2 + $0xf0] sm:$0xff] %v1101
  %1228 = vst [vmem:[%s2 + $0xf8] sm:$0xff] %v1102
  %1229 = vst [vmem:[%s2 + $0x100] sm:$0xff] %v1103
  %1230 = vst [vmem:[%s2 + $0x108] sm:$0xff] %v1104
  %1231 = vst.msk [vmem:[%s2 + $0x110] sm:$0xff] %vm405, %v1105
  %1232 = vst [vmem:[%s2 + $0x118] sm:$0xff] %v1106
  %1233 = vst [vmem:[%s2 + $0x120] sm:$0xff] %v1107
  %1234 = vst [vmem:[%s2 + $0x128] sm:$0xff] %v1108
  %1235 = vst [vmem:[%s2 + $0x130] sm:$0xff] %v1109
  %1236 = vst [vmem:[%s2 + $0x138] sm:$0xff] %v1110
  %1237 = vst [vmem:[%s2 + $0x140] sm:$0xff] %v1111
  %1238 = vst.msk [vmem:[%s2 + $0x148] sm:$0xff] %vm405, %v1112
  %1239 = vst [vmem:[%s2 + $0x150] sm:$0xff] %v1113
  %1240 = vst [vmem:[%s2 + $0x158] sm:$0xff] %v1114
  %1241 = vst [vmem:[%s2 + $0x160] sm:$0xff] %v1115
  %1242 = vst [vmem:[%s2 + $0x168] sm:$0xff] %v1116
  %1243 = vst [vmem:[%s2 + $0x170] sm:$0xff] %v1117
  %1244 = vst [vmem:[%s2 + $0x178] sm:$0xff] %v1118
  %1245 = vst.msk [vmem:[%s2 + $0x180] sm:$0xff] %vm405, %v1119
  %1246 = vst [vmem:[%s2 + $0x188] sm:$0xff] %v1120
  %1247 = vst [vmem:[%s2 + $0x190] sm:$0xff] %v1121
  %1248 = vst [vmem:[%s2 + $0x198] sm:$0xff] %v1122
  %1249 = vst [vmem:[%s2 + $0x1a0] sm:$0xff] %v1123
  %1250 = vst [vmem:[%s2 + $0x1a8] sm:$0xff] %v1124
  %1251 = vst [vmem:[%s2 + $0x1b0] sm:$0xff] %v1125
  %1252 = vst.msk [vmem:[%s2 + $0x1b8] sm:$0xff] %vm405, %v1126
  %1253 = vst [vmem:[%s2 + $0x1c0] sm:$0xff] %v1127
  %1254 = vst [vmem:[%s2 + $0x1c8] sm:$0xff] %v1128
  %1255 = vst [vmem:[%s2 + $0x1d0] sm:$0xff] %v1129
  %1256 = vst [vmem:[%s2 + $0x1d8] sm:$0xff] %v1130
  %1257 = vst [vmem:[%s2 + $0x1e0] sm:$0xff] %v1131
  %1258 = vst [vmem:[%s2 + $0x1e8] sm:$0xff] %v1132
  %1259 = vst.msk [vmem:[%s2 + $0x1f0] sm:$0xff] %vm405, %v1133
  %1260 = vst [vmem:[%s2 + $0x1f8] sm:$0xff] %v1134
  %1261 = vst [vmem:[%s2 + $0x200] sm:$0xff] %v1135
  %1262 = vst [vmem:[%s2 + $0x208] sm:$0xff] %v1136
  %1263 = vst [vmem:[%s2 + $0x210] sm:$0xff] %v1137
  %1264 = vst [vmem:[%s2 + $0x218] sm:$0xff] %v1138
  %1265 = vst [vmem:[%s2 + $0x220] sm:$0xff] %v1139
  %1266 = vst.msk [vmem:[%s2 + $0x228] sm:$0xff] %vm405, %v1140
  %1267 = vst [vmem:[%s2 + $0x230] sm:$0xff] %v1141
  %1268 = vst [vmem:[%s2 + $0x238] sm:$0xff] %v1142
  %1269 = vst [vmem:[%s2 + $0x240] sm:$0xff] %v1143
  %1270 = vst [vmem:[%s2 + $0x248] sm:$0xff] %v1144
  %1271 = vst [vmem:[%s2 + $0x250] sm:$0xff] %v1145
  %1272 = vst [vmem:[%s2 + $0x258] sm:$0xff] %v1146
  %1273 = vst.msk [vmem:[%s2 + $0x260] sm:$0xff] %vm405, %v1147
  %1274 = vst [vmem:[%s2 + $0x268] sm:$0xff] %v1148
  %1275 = vst [vmem:[%s2 + $0x270] sm:$0xff] %v1149
  %1276 = vst [vmem:[%s2 + $0x278] sm:$0xff] %v1150
  %1277 = vst [vmem:[%s2 + $0x280] sm:$0xff] %v1151
  %1278 = vst [vmem:[%s2 + $0x288] sm:$0xff] %v1152
  %1279 = vst [vmem:[%s2 + $0x290] sm:$0xff] %v1153
  %1280 = vst.msk [vmem:[%s2 + $0x298] sm:$0xff] %vm405, %v1154
  %1281 = vst [vmem:[%s2 + $0x2a0] sm:$0xff] %v1155
  %1282 = vst [vmem:[%s2 + $0x2a8] sm:$0xff] %v1156
  %1283 = vst [vmem:[%s2 + $0x2b0] sm:$0xff] %v1157
  %1284 = vst [vmem:[%s2 + $0x2b8] sm:$0xff] %v1158
  %1285 = vst [vmem:[%s2 + $0x2c0] sm:$0xff] %v1159
  %1286 = vst [vmem:[%s2 + $0x2c8] sm:$0xff] %v1160
  %1287 = vst.msk [vmem:[%s2 + $0x2d0] sm:$0xff] %vm405, %v1161
  %1288 = vst [vmem:[%s2 + $0x2d8] sm:$0xff] %v1162
  %1289 = vst [vmem:[%s2 + $0x2e0] sm:$0xff] %v1163
  %1290 = vst [vmem:[%s2 + $0x2e8] sm:$0xff] %v1164
  %1291 = vst [vmem:[%s2 + $0x2f0] sm:$0xff] %v1165
  %1292 = vst [vmem:[%s2 + $0x2f8] sm:$0xff] %v1166
  %1293 = vst [vmem:[%s2 + $0x300] sm:$0xff] %v1167
  %1294 = vst.msk [vmem:[%s2 + $0x308] sm:$0xff] %vm405, %v1168
  %1295 = vst [vmem:[%s2 + $0x310] sm:$0xff] %v1169
  %1296 = vst [vmem:[%s2 + $0x318] sm:$0xff] %v1170
  %1297 = vst [vmem:[%s2 + $0x320] sm:$0xff] %v1171
  %1298 = vst [vmem:[%s2 + $0x328] sm:$0xff] %v1172
  %1299 = vst [vmem:[%s2 + $0x330] sm:$0xff] %v1173
  %1300 = vst [vmem:[%s2 + $0x338] sm:$0xff] %v1174
  %1301 = vst.msk [vmem:[%s2 + $0x340] sm:$0xff] %vm405, %v1175
  %1302 = vst [vmem:[%s2 + $0x348] sm:$0xff] %v1176
  %1303 = vst [vmem:[%s2 + $0x350] sm:$0xff] %v1177
  %1304 = vst [vmem:[%s2 + $0x358] sm:$0xff] %v1178
  %1305 = vst [vmem:[%s2 + $0x360] sm:$0xff] %v1179
  %1306 = vst [vmem:[%s2 + $0x368] sm:$0xff] %v1180
  %1307 = vst [vmem:[%s2 + $0x370] sm:$0xff] %v1181
  %1308 = vst.msk [vmem:[%s2 + $0x378] sm:$0xff] %vm405, %v1182
  %1309 = vst [vmem:[%s2 + $0x380] sm:$0xff] %v1183
  %1310 = vst [vmem:[%s2 + $0x388] sm:$0xff] %v1184
  %1311 = vst [vmem:[%s2 + $0x390] sm:$0xff] %v1185
  %1312 = vst [vmem:[%s2 + $0x398] sm:$0xff] %v1186
  %1313 = vst [vmem:[%s2 + $0x3a0] sm:$0xff] %v1187
  %1314 = vst [vmem:[%s2 + $0x3a8] sm:$0xff] %v1188
  %1315 = vst.msk [vmem:[%s2 + $0x3b0] sm:$0xff] %vm405, %v1189
  %1316 = vst [vmem:[%s2 + $0x3b8] sm:$0xff] %v1190
  %1317 = vst [vmem:[%s2 + $0x3c0] sm:$0xff] %v1191
  %1318 = vst [vmem:[%s2 + $0x3c8] sm:$0xff] %v1192
  %1319 = vst [vmem:[%s2 + $0x3d0] sm:$0xff] %v1193
  %1320 = vst [vmem:[%s2 + $0x3d8] sm:$0xff] %v1194
  %1321 = vst [vmem:[%s2 + $0x3e0] sm:$0xff] %v1195
  %1322 = vst.msk [vmem:[%s2 + $0x3e8] sm:$0xff] %vm405, %v1196
  // Predicated region
  $region10: #{channel_scale_mul.1} parent=0 // pred_check
    _
  $region11: #{channel_scale_mul.1} parent=0 // pred_check_branch
    %1324 = sbr.rel (0) target = $region13
  $region12: #{channel_scale_mul.1} parent=0 // pred_region
    _
  $region13: #{channel_scale_mul.1} parent=0 // pred_fallthru
    _
  // Predicated region
  $region14: #{channel_scale_mul.1} parent=0 // pred_check
    _
  $region15: #{channel_scale_mul.1} parent=0 // pred_check_branch
    %1326 = sbr.rel (0) target = $region17
  $region16: #{channel_scale_mul.1} parent=0 // pred_region
    _
  $region17: #{channel_scale_mul.1} parent=0 // pred_fallthru
    _

</llo_original>
